<compile_context>
chip_gen: v7x
topology: tpu7x:2x2x1
jax: 0.10.0
libtpu: 0.0.40
codegen_flags: <defaults>
</compile_context>

<pallas_src>
import functools

import jax
import jax.numpy as jnp
from jax.experimental import pallas as pl
from jax.experimental.pallas import tpu as pltpu

LANES = 128
SUBLANES_32BIT = 8
_LANE_CANDIDATES = (4096, 2048, 1024, 512, 256, 128)


def _leaky_relu_kernel(x_ref, o_ref, *, negative_slope):
    x = x_ref[...]
    zero = jnp.zeros((), dtype=x.dtype)
    slope = jnp.asarray(negative_slope, dtype=x.dtype)
    # Exact torch expression: clamp(x, min=0) + clamp(x, max=0) * slope
    o_ref[...] = jnp.maximum(x, zero) + jnp.minimum(x, zero) * slope


def _leaky_relu_jax(x, negative_slope):
    zero = jnp.zeros((), dtype=x.dtype)
    slope = jnp.asarray(negative_slope, dtype=x.dtype)
    return jnp.maximum(x, zero) + jnp.minimum(x, zero) * slope


def _round_up(a, b):
    return (a + b - 1) // b * b


def _vmem_capacity_bytes():
    """Per-core VMEM capacity; conservative (v7x) fallback if the query fails."""
    try:
        info = pltpu.get_tpu_info()
        cap = getattr(info, "vmem_capacity_bytes", None)
        if cap:
            return int(cap)
    except Exception:
        pass
    return 64 << 20


def my_leaky_relu(x, negative_slope=0.01, *, target_tile_bytes=None, donate=False):
    """Elementwise LeakyReLU matching MyLeakyReLU.forward exactly."""
    orig_shape = x.shape
    dtype = x.dtype
    n = x.size
    if n == 0:
        return x

    itemsize = jnp.dtype(dtype).itemsize
    # Sub-32-bit dtypes pack along sublanes: 8 for f32, 16 for bf16, 32 for i8.
    sublanes = max(SUBLANES_32BIT, 32 // max(itemsize, 1))

    # --- Layout: widest lane slab reachable by a zero-copy row-major reshape.
    # Prefer a slab whose row count fills the sublanes; only the lane count has
    # to divide n (a partial last grid block handles any row remainder).
    lanes = None
    for cand in _LANE_CANDIDATES:
        if n % cand == 0 and n // cand >= sublanes:
            lanes = cand
            break
    if lanes is None:
        for cand in _LANE_CANDIDATES:
            if n % cand == 0:
                lanes = cand
                break
    if lanes is None:
        # Awkward size (not a multiple of 128).  A standalone elementwise kernel
        # is HBM-bound; pad + slice would ~3x the HBM traffic, so hand the
        # identical expression to XLA and let it fuse instead.
        return _leaky_relu_jax(x, negative_slope)

    rows = n // lanes
    x2d = x.reshape(rows, lanes)  # free row-major bitcast, no data movement

    vmem_cap = _vmem_capacity_bytes()
    vmem_budget = int(0.75 * vmem_cap)  # leave compiler-internal scratch headroom

    if target_tile_bytes is None:
        # ~2 MiB already sits on the HBM roofline plateau; 4 MiB only shaves the
        # ~0.35 us/step overhead and is free on 128 MiB-VMEM chips (v5e/v6e).
        # v7x (64 MiB per TC) stays at 2 MiB.
        target_tile_bytes = (4 << 20) if vmem_cap > (64 << 20) else (2 << 20)

    # --- Row tile: ~target_tile_bytes, multiple of `sublanes`, within budget.
    if rows <= sublanes:
        tr = rows  # block equals the full (tiny) row extent
    else:
        tr = (target_tile_bytes // itemsize // lanes) // sublanes * sublanes
        tr = max(sublanes, tr)
        # Keep in + out double-buffering (+ headroom) inside the VMEM budget.
        tr_budget = (vmem_budget // (6 * lanes * itemsize)) // sublanes * sublanes
        tr = min(tr, max(sublanes, tr_budget))
        # Don't exceed the array; Pallas masks the partial last block.
        tr = min(tr, max(sublanes, (rows // sublanes) * sublanes))
        # Aim for >= 8 grid steps (>= 4 per TensorCore on v7x megacore) so the
        # prefetch/compute/writeback pipeline stays full — but never shrink a
        # tile below ~1 MiB (per-step overhead would dominate).
        target_steps = 8
        if pl.cdiv(rows, tr) < target_steps:
            min_tr = max(sublanes,
                         ((1 << 20) // itemsize // lanes) // sublanes * sublanes)
            tr = min(tr, max(min_tr, _round_up(pl.cdiv(rows, target_steps), sublanes)))

    grid = (pl.cdiv(rows, tr),)  # partial last block handled by Pallas
    tile_bytes = tr * lanes * itemsize
    vmem_limit = int(min(vmem_budget, max(32 << 20, 6 * tile_bytes)))

    kernel = functools.partial(_leaky_relu_kernel, negative_slope=negative_slope)

    out2d = pl.pallas_call(
        kernel,
        out_shape=jax.ShapeDtypeStruct((rows, lanes), dtype),
        grid=grid,
        in_specs=[pl.BlockSpec((tr, lanes), lambda i: (i, 0))],
        out_specs=pl.BlockSpec((tr, lanes), lambda i: (i, 0)),
        compiler_params=pltpu.CompilerParams(
            dimension_semantics=("parallel",),
            vmem_limit_bytes=vmem_limit,
        ),
        # Memory-dominated advisory cost so XLA can overlap neighbouring ops.
        cost_estimate=pl.CostEstimate(
            flops=2 * n, transcendentals=0, bytes_accessed=2 * n * itemsize),
        # Only alias when the caller actually donates the input buffer;
        # otherwise XLA would insert a defensive copy (extra HBM traffic).
        input_output_aliases=({0: 0} if donate else {}),
    )(x2d)

    return out2d.reshape(orig_shape)


def _reference(x, negative_slope=0.01):
    # Pure-JAX reference mirroring the torch expression exactly.
    return jnp.clip(x, 0.0, None) + jnp.clip(x, None, 0.0) * negative_slope


if __name__ == "__main__":
    key = jax.random.PRNGKey(0)

    # NCHW-like input consistent with how the module is used in conv/MLP stacks.
    x = jax.random.normal(key, (2, 4, 16, 16), dtype=jnp.float32)
    out = jax.block_until_ready(my_leaky_relu(x, negative_slope=0.01))
    ref = _reference(x, negative_slope=0.01)
    assert out.shape == x.shape and out.dtype == x.dtype
    assert jnp.allclose(out, ref, atol=1e-6, rtol=1e-6)

    # Awkward (non-128-divisible) size: exercises the fused pure-JAX fallback.
    x2 = jax.random.normal(jax.random.PRNGKey(1), (3, 5, 7), dtype=jnp.float32)
    out2 = jax.block_until_ready(my_leaky_relu(x2, negative_slope=0.2))
    assert jnp.allclose(out2, _reference(x2, negative_slope=0.2), atol=1e-6, rtol=1e-6)

    # bf16 path exercises the 16-sublane alignment branch.
    x3 = jax.random.normal(jax.random.PRNGKey(2), (2, 4, 16, 16), dtype=jnp.bfloat16)
    out3 = jax.block_until_ready(my_leaky_relu(x3, negative_slope=0.01))
    assert out3.dtype == jnp.bfloat16
    assert jnp.allclose(
        out3.astype(jnp.float32),
        _reference(x3, negative_slope=0.01).astype(jnp.float32),
        atol=1e-2, rtol=1e-2,
    )

    # Multi-step grid (small target tile forces 8 grid steps, full pipeline).
    x4 = jax.random.normal(jax.random.PRNGKey(3), (16, 8, 16, 128), dtype=jnp.float32)
    out4 = jax.block_until_ready(
        my_leaky_relu(x4, negative_slope=0.05, target_tile_bytes=128 * 1024))
    assert jnp.allclose(out4, _reference(x4, negative_slope=0.05), atol=1e-6, rtol=1e-6)

    # Partial last grid block (rows not a multiple of the row tile).
    x5 = jax.random.normal(jax.random.PRNGKey(4), (5, 32, 32), dtype=jnp.float32)
    out5 = jax.block_until_ready(my_leaky_relu(x5, negative_slope=0.1))
    assert jnp.allclose(out5, _reference(x5, negative_slope=0.1), atol=1e-6, rtol=1e-6)

    print("KERNEL_OK")
</pallas_src>

<mosaic_0001>
module attributes {stable_mosaic.version = 11 : i64} {
  func.func @_leaky_relu_kernel(%arg0: i32, %arg1: memref<8x256xf32, #tpu.memory_space<vmem>>, %arg2: memref<8x256xf32, #tpu.memory_space<vmem>>) attributes {dimension_semantics = [#tpu.dimension_semantics<parallel>], iteration_bounds = array<i64: 1>, scalar_prefetch = 0 : i64, scratch_operands = 0 : i64, tpu.core_type = #tpu.core_type<tc>, window_params = [{transform_indices = @transform_0, window_bounds = array<i64: 8, 256>}, {transform_indices = @transform_1, window_bounds = array<i64: 8, 256>}]} {
    %c0 = arith.constant 0 : index
    %c0_0 = arith.constant 0 : index
    %0 = vector.load %arg1[%c0, %c0_0] : memref<8x256xf32, #tpu.memory_space<vmem>>, vector<8x256xf32>
    %cst = arith.constant 0.000000e+00 : f32
    %1 = vector.broadcast %cst : f32 to vector<8x256xf32>
    %2 = arith.maximumf %0, %1 : vector<8x256xf32>
    %cst_1 = arith.constant 0.000000e+00 : f32
    %3 = vector.broadcast %cst_1 : f32 to vector<8x256xf32>
    %4 = arith.minimumf %0, %3 : vector<8x256xf32>
    %cst_2 = arith.constant 0.00999999977 : f32
    %5 = vector.broadcast %cst_2 : f32 to vector<8x256xf32>
    %6 = arith.mulf %4, %5 : vector<8x256xf32>
    %7 = arith.addf %2, %6 : vector<8x256xf32>
    %c0_3 = arith.constant 0 : index
    %c0_4 = arith.constant 0 : index
    %8 = vector.load %arg2[%c0_3, %c0_4] : memref<8x256xf32, #tpu.memory_space<vmem>>, vector<8x256xf32>
    tpu.vector_store %arg2[%c0_3, %c0_4], %7 {strides = array<i32>} : memref<8x256xf32, #tpu.memory_space<vmem>>, vector<8x256xf32>,
    return
  }
  func.func @transform_0(%arg0: i32) -> (i32, i32) {
    %c0_i32 = arith.constant 0 : i32
    %c0_i32_0 = arith.constant 0 : i32
    return %arg0, %c0_i32 : i32, i32
  }
  func.func @transform_1(%arg0: i32) -> (i32, i32) {
    %c0_i32 = arith.constant 0 : i32
    %c0_i32_0 = arith.constant 0 : i32
    return %arg0, %c0_i32 : i32, i32
  }
}

</mosaic_0001>

<llo_original>
// kernel: tpu_custom_call.1
$region0: #{tpu_custom_call.1}
  #allocation0 [shape = 'u32[]', space=smem, size = 0x4, offset = 0x4, fixed_abs, tag = 'smem constant byte address 0x4 - core index']
  #allocation1 [shape = 'u32[144,128]{1,0:T(1,128)}', space=vmem, size = 0x12000, scoped, tag = 'internal scratch']
  %s0 = inlined_call_operand.hbm [shape: f32[8,256], index: 0, kind: input, shape index: {}]
  %s1 = inlined_call_operand.hbm [shape: f32[8,256], index: 1, kind: output, shape index: {}]
  %s2 = sld [smem:[#allocation0]]
  $region18: #{tpu_custom_call.1} parent=0
    _
  %s4 = ssub.s32 1, %s2
  %s5 = scalar_select 0, %s4, %s2
  $region1: #{tpu_custom_call.1} parent=0
    #allocation2 [shape = 'u8[8192]{0}', space=vmem, size = 0x2000, scoped, tag = 'input window, operand 0, single buffered']
    #allocation3 [shape = 's32[1]{0}', space=sflag, size = 0x4, scoped, tag = 'scoped memory for tpu_custom_call.1']
    #allocation4 [shape = 's32[1]{0}', space=sflag, size = 0x4, scoped, tag = 'scoped memory for tpu_custom_call.1']
    #allocation5 [shape = 'u8[8192]{0}', space=vmem, size = 0x2000, scoped, tag = 'output window, operand 0, single buffered']
    %6 = vsyncpa [#allocation3], 0
    %7 = vsyncpa [#allocation4], 0
    // Predicated region
    $region2: #{tpu_custom_call.1} parent=1 // pred_check
      _
    $region3: #{tpu_custom_call.1} parent=1 // pred_check_branch
      %9 = sbr.rel (0) target = $region5
    $region4: #{tpu_custom_call.1} parent=1 // pred_region
      %s11 = ssub.s32 256, 256
      %12 = vsyncadd [#allocation3], %s11
      %s14 = sshll.u32 [#allocation2], 4
      %s15 = int_to_ptr.vmem [resolvable:$true] %s14
      %17 = dma.hbm_to_vmem [thread:$0]  %s0, 256, %s15, [#allocation3]
    $region5: #{tpu_custom_call.1} parent=1 // pred_fallthru
      _
    // Predicated region
    $region6: #{tpu_custom_call.1} parent=1 // pred_check
      _
    $region7: #{tpu_custom_call.1} parent=1 // pred_check_branch
      %19 = sbr.rel (0) target = $region9
    $region8: #{tpu_custom_call.1} parent=1 // pred_region
      %20 = dma.done [#allocation3], 256
    $region9: #{tpu_custom_call.1} parent=1 // pred_fallthru
      _
    %v21 = vld [vmem:[#allocation2] sm:$0xff]
    %v22 = vld [vmem:[#allocation2 + $0x8] sm:$0xff]
    %v23 = vmax.f32 %v21, 0.0
    %v24 = vmax.f32 %v22, 0.0
    %v25 = vmin.f32 %v21, 0.0
    %v26 = vmin.f32 %v22, 0.0
    %v27 = vmul.f32 %v25, 0.01
    %v28 = vmul.f32 %v26, 0.01
    %v29 = vadd.f32 %v23, %v27
    %v30 = vadd.f32 %v24, %v28
    %31 = vst [vmem:[#allocation5] sm:$0xff] %v29
    %32 = vst [vmem:[#allocation5 + $0x8] sm:$0xff] %v30
    // Predicated region
    $region10: #{tpu_custom_call.1} parent=1 // pred_check
      _
    $region11: #{tpu_custom_call.1} parent=1 // pred_check_branch
      %34 = sbr.rel (0) target = $region13
    $region12: #{tpu_custom_call.1} parent=1 // pred_region
      %s36 = ssub.s32 256, 256
      %37 = vsyncadd [#allocation4], %s36
      %s39 = sshll.u32 [#allocation5], 4
      %s40 = int_to_ptr.vmem [resolvable:$true] %s39
      %42 = dma.vmem_to_hbm [thread:$0]  %s40, 256, %s1, [#allocation4]
    $region13: #{tpu_custom_call.1} parent=1 // pred_fallthru
      _
    // Predicated region
    $region14: #{tpu_custom_call.1} parent=1 // pred_check
      _
    $region15: #{tpu_custom_call.1} parent=1 // pred_check_branch
      %44 = sbr.rel (0) target = $region17
    $region16: #{tpu_custom_call.1} parent=1 // pred_region
      %45 = dma.done [#allocation4], 256
    $region17: #{tpu_custom_call.1} parent=1 // pred_fallthru
      _
    %46 = vsyncpa [#allocation3], 1
    %47 = vsyncpa [#allocation4], 1

</llo_original>
